<compile_context>
chip_gen: v6e
topology: v6e:2x2x1
jax: 0.10.0
libtpu: 0.0.40
codegen_flags: <defaults>
</compile_context>

<pallas_src>
import math

import jax
import jax.numpy as jnp
from jax.experimental import pallas as pl
from jax.experimental.pallas import tpu as pltpu

_SHIFT = math.log(2.0)  # matches torch.log(torch.tensor(2.0)).item()
_LANE = 128
_MIN_KERNEL_ELEMS = 16 * 1024          # below this, fused XLA is strictly faster
_VMEM_LIMIT_BYTES = 28 * 1024 * 1024   # safe on v5e/v6e (128 MiB phys) and v7x (64 MiB phys)


def _shifted_softplus_kernel(x_ref, o_ref):
    x = x_ref[...].astype(jnp.float32)
    # numerically-stable softplus: max(x, 0) + log1p(exp(-|x|))
    sp = jnp.maximum(x, 0.0) + jnp.log1p(jnp.exp(-jnp.abs(x)))
    o_ref[...] = (sp - _SHIFT).astype(o_ref.dtype)


def _shifted_softplus_xla(x: jax.Array) -> jax.Array:
    """Plain-XLA path for small activations; same stable formula, fuses freely."""
    xf = x.astype(jnp.float32)
    sp = jnp.maximum(xf, 0.0) + jnp.log1p(jnp.exp(-jnp.abs(xf)))
    return (sp - _SHIFT).astype(x.dtype)


def _default_block_bytes() -> int:
    """2 MiB on v5e (already >=5us DMA/step, and 4x4 MiB would hit its 16 MiB
    scoped default); 4 MiB on v6e/v7x where higher HBM BW makes the ~0.35us
    per-step cost proportionally larger."""
    try:
        kind = jax.devices()[0].device_kind.lower()
    except Exception:
        return 2 * 1024 * 1024
    if any(tag in kind for tag in ("v6", "v7", "trillium")):
        return 4 * 1024 * 1024
    return 2 * 1024 * 1024


def shifted_softplus(
    x: jax.Array,
    *,
    target_block_bytes: int | None = None,
    min_kernel_elems: int = _MIN_KERNEL_ELEMS,
) -> jax.Array:
    """Elementwise shifted softplus via a Pallas TPU kernel. Works on any shape."""
    if not jnp.issubdtype(x.dtype, jnp.floating):
        raise TypeError(f"shifted_softplus expects a floating dtype, got {x.dtype}")

    orig_shape = x.shape
    dtype = x.dtype
    n = x.size
    if n == 0:
        return x
    if n < min_kernel_elems:
        # Too small to amortize a custom-call launch / worth keeping XLA fusion.
        return _shifted_softplus_xla(x)

    if target_block_bytes is None:
        target_block_bytes = _default_block_bytes()

    itemsize = jnp.dtype(dtype).itemsize

    # ---- pick a lane-dense 2-D view --------------------------------------
    if x.ndim >= 2 and x.shape[-1] % _LANE == 0:
        # Natural last dim already lane-aligned: keep it, collapse leading dims.
        # Avoids a flatten that could force a physical relayout of the
        # (8,128)-tiled HBM layout.
        lanes = x.shape[-1]
        x2d = x.reshape(-1, lanes)
        pad = 0
    else:
        lanes = _LANE
        flat = x.reshape(-1)
        pad = (-n) % _LANE
        if pad:
            # One padding copy on the way in; output is sliced back below.
            flat = jnp.pad(flat, (0, pad))
        x2d = flat.reshape(-1, lanes)

    rows = x2d.shape[0]
    sub = max(8, 32 // itemsize)  # sublane packing: 8 (f32), 16 (bf16/f16)

    # ---- block rows from the VMEM budget ---------------------------------
    br_target = max(sub, (target_block_bytes // (lanes * itemsize)) // sub * sub)
    num_blocks = pl.cdiv(rows, br_target)
    # Give the v7x megacore (2 TCs) something to shard for non-tiny inputs.
    if n * itemsize >= (1 << 20):
        num_blocks = max(num_blocks, 4)
    br = pl.cdiv(rows, num_blocks)   # balance so the last-block overhang is small
    br = pl.cdiv(br, sub) * sub      # keep a multiple of the sublane packing
    if br >= rows:
        br = rows                    # full-extent block is always legal
    grid = (pl.cdiv(rows, br),)      # last block may overhang; Pallas masks it

    cost = pl.CostEstimate(
        flops=4 * n,
        transcendentals=2 * n,
        bytes_accessed=2 * n * itemsize,
    )

    out2d = pl.pallas_call(
        _shifted_softplus_kernel,
        out_shape=jax.ShapeDtypeStruct((rows, lanes), dtype),
        grid_spec=pltpu.PrefetchScalarGridSpec(
            num_scalar_prefetch=0,
            grid=grid,
            in_specs=[pl.BlockSpec((br, lanes), lambda i: (i, 0))],
            out_specs=pl.BlockSpec((br, lanes), lambda i: (i, 0)),
        ),
        compiler_params=pltpu.CompilerParams(
            dimension_semantics=("parallel",),
            vmem_limit_bytes=_VMEM_LIMIT_BYTES,
        ),
        cost_estimate=cost,
    )(x2d)

    if pad:
        return out2d.reshape(-1)[:n].reshape(orig_shape)
    return out2d.reshape(orig_shape)


if __name__ == "__main__":
    key = jax.random.PRNGKey(0)

    def ref(x):
        return jax.nn.softplus(x) - _SHIFT

    # 1) Primary check: small NCHW input (module's typical use). Force the
    #    kernel path (n=2048 < default XLA threshold) to exercise the flatten path.
    x = jax.random.normal(key, (2, 4, 16, 16), dtype=jnp.float32)
    y = jax.block_until_ready(shifted_softplus(x, min_kernel_elems=0))
    assert y.shape == x.shape and y.dtype == x.dtype
    assert jnp.allclose(y, ref(x), atol=1e-5, rtol=1e-5)

    # 2) Lane-aligned last dim (>= default threshold): natural-last-dim path,
    #    no flatten, default kernel path.
    x2 = jax.random.normal(jax.random.PRNGKey(0), (2, 64, 128), dtype=jnp.float32)
    y2 = jax.block_until_ready(shifted_softplus(x2))
    assert jnp.allclose(y2, ref(x2), atol=1e-5, rtol=1e-5)

    # 3) Ragged size: pad-once path, output sliced back (no slice+concat pair).
    x3 = jax.random.normal(jax.random.PRNGKey(0), (3, 7, 50), dtype=jnp.float32)
    y3 = jax.block_until_ready(shifted_softplus(x3, min_kernel_elems=0))
    assert jnp.allclose(y3, ref(x3), atol=1e-5, rtol=1e-5)

    # 4) Multi-block grid with an overhanging (masked) last block.
    x4 = jax.random.normal(jax.random.PRNGKey(0), (20 * 128,), dtype=jnp.float32)
    y4 = jax.block_until_ready(
        shifted_softplus(x4, target_block_bytes=8192, min_kernel_elems=0)
    )
    assert jnp.allclose(y4, ref(x4), atol=1e-5, rtol=1e-5)

    # 5) Small tensor on the default settings -> fused XLA fallback path.
    x5 = jax.random.normal(jax.random.PRNGKey(0), (4, 8, 32), dtype=jnp.float32)
    y5 = jax.block_until_ready(shifted_softplus(x5))
    assert jnp.allclose(y5, ref(x5), atol=1e-5, rtol=1e-5)

    # 6) bf16 I/O (f32 compute inside the kernel).
    x6 = jax.random.normal(jax.random.PRNGKey(0), (4, 16, 128), dtype=jnp.bfloat16)
    y6 = jax.block_until_ready(shifted_softplus(x6, min_kernel_elems=0))
    assert y6.dtype == jnp.bfloat16
    assert jnp.allclose(
        y6.astype(jnp.float32), ref(x6.astype(jnp.float32)), atol=2e-2, rtol=2e-2
    )

    print("KERNEL_OK")
</pallas_src>

<mosaic_0001>
module attributes {stable_mosaic.version = 11 : i64} {
  func.func @_shifted_softplus_kernel(%arg0: i32, %arg1: memref<16x128xf32, #tpu.memory_space<vmem>>, %arg2: memref<16x128xf32, #tpu.memory_space<vmem>>) attributes {dimension_semantics = [#tpu.dimension_semantics<parallel>], iteration_bounds = array<i64: 1>, scalar_prefetch = 0 : i64, scratch_operands = 0 : i64, tpu.core_type = #tpu.core_type<tc>, window_params = [{transform_indices = @transform_0, window_bounds = array<i64: 16, 128>}, {transform_indices = @transform_1, window_bounds = array<i64: 16, 128>}]} {
    %c0 = arith.constant 0 : index
    %c0_0 = arith.constant 0 : index
    %0 = vector.load %arg1[%c0, %c0_0] : memref<16x128xf32, #tpu.memory_space<vmem>>, vector<16x128xf32>
    %cst = arith.constant 0.000000e+00 : f32
    %1 = vector.broadcast %cst : f32 to vector<16x128xf32>
    %2 = arith.maximumf %0, %1 : vector<16x128xf32>
    %3 = math.absf %0 : vector<16x128xf32>
    %cst_1 = arith.constant 0.000000e+00 : f32
    %4 = vector.broadcast %cst_1 : f32 to vector<16x128xf32>
    %5 = arith.subf %4, %3 : vector<16x128xf32>
    %6 = math.exp %5 : vector<16x128xf32>
    %7 = math.log1p %6 : vector<16x128xf32>
    %8 = arith.addf %2, %7 : vector<16x128xf32>
    %cst_2 = arith.constant 0.693147182 : f32
    %9 = vector.broadcast %cst_2 : f32 to vector<16x128xf32>
    %10 = arith.subf %8, %9 : vector<16x128xf32>
    %c0_3 = arith.constant 0 : index
    %c0_4 = arith.constant 0 : index
    %11 = vector.load %arg2[%c0_3, %c0_4] : memref<16x128xf32, #tpu.memory_space<vmem>>, vector<16x128xf32>
    tpu.vector_store %arg2[%c0_3, %c0_4], %10 {strides = array<i32>} : memref<16x128xf32, #tpu.memory_space<vmem>>, vector<16x128xf32>,
    return
  }
  func.func @transform_0(%arg0: i32) -> (i32, i32) {
    %c0_i32 = arith.constant 0 : i32
    %c0_i32_0 = arith.constant 0 : i32
    return %arg0, %c0_i32 : i32, i32
  }
  func.func @transform_1(%arg0: i32) -> (i32, i32) {
    %c0_i32 = arith.constant 0 : i32
    %c0_i32_0 = arith.constant 0 : i32
    return %arg0, %c0_i32 : i32, i32
  }
}

</mosaic_0001>

<llo_original>
// kernel: tpu_custom_call.1
$region0: #{tpu_custom_call.1}
  #allocation0 [shape = 'u32[]', space=smem, size = 0x4, offset = 0x4, fixed_abs, tag = 'smem constant byte address 0x4 - core index']
  #allocation1 [shape = 'u32[144,128]{1,0:T(1,128)}', space=vmem, size = 0x12000, scoped, tag = 'internal scratch']
  %s0 = inlined_call_operand.hbm [shape: f32[16,128], index: 0, kind: input, shape index: {}]
  %s1 = inlined_call_operand.hbm [shape: f32[16,128], index: 1, kind: output, shape index: {}]
  %s2 = sld [smem:[#allocation0]]
  $region18: #{tpu_custom_call.1} parent=0
    _
  %s4 = ssub.s32 1, %s2
  %s5 = scalar_select 0, %s4, %s2
  $region1: #{tpu_custom_call.1} parent=0
    #allocation2 [shape = 'u8[8192]{0}', space=vmem, size = 0x2000, scoped, tag = 'input window, operand 0, single buffered']
    #allocation3 [shape = 's32[1]{0}', space=sflag, size = 0x4, scoped, tag = 'scoped memory for tpu_custom_call.1']
    #allocation4 [shape = 's32[1]{0}', space=sflag, size = 0x4, scoped, tag = 'scoped memory for tpu_custom_call.1']
    #allocation5 [shape = 'u8[8192]{0}', space=vmem, size = 0x2000, scoped, tag = 'output window, operand 0, single buffered']
    %6 = vsyncpa [#allocation3], 0
    %7 = vsyncpa [#allocation4], 0
    // Predicated region
    $region2: #{tpu_custom_call.1} parent=1 // pred_check
      _
    $region3: #{tpu_custom_call.1} parent=1 // pred_check_branch
      %9 = sbr.rel (0) target = $region5
    $region4: #{tpu_custom_call.1} parent=1 // pred_region
      %s11 = ssub.s32 256, 256
      %12 = vsyncadd [#allocation3], %s11
      %s13 = sshll.u32 [#allocation2], 4
      %s14 = int_to_ptr.vmem [resolvable:$true] %s13
      %19 = dma.hbm_to_vmem [thread:$0]  %s0, 256, %s14, [#allocation3], 128, 128, 8
    $region5: #{tpu_custom_call.1} parent=1 // pred_fallthru
      _
    // Predicated region
    $region6: #{tpu_custom_call.1} parent=1 // pred_check
      _
    $region7: #{tpu_custom_call.1} parent=1 // pred_check_branch
      %21 = sbr.rel (0) target = $region9
    $region8: #{tpu_custom_call.1} parent=1 // pred_region
      %22 = dma.done [#allocation3], 256
    $region9: #{tpu_custom_call.1} parent=1 // pred_fallthru
      _
    %v23 = vld [vmem:[#allocation2] sm:$0xff]
    %v24 = vld [vmem:[#allocation2 + $0x8] sm:$0xff]
    %v25 = vmax.f32 %v23, 0.0
    %v26 = vmax.f32 %v24, 0.0
    %v27 = vand.u32 2147483647, %v23
    %v28 = vand.u32 2147483647, %v24
    %v29 = vsub.f32 0.0, %v27
    %v30 = vsub.f32 0.0, %v28
    %v31 = vmul.f32 %v29, 1.442695
    %v32 = vpow.pop %v31
    %v33 = vmul.f32 %v30, 1.442695
    %v34 = vpow.pop %v33
    %v35 = vadd.f32 %v32, 1.0
    %v36 = vlog2.pop %v35
    %v37 = vmul.f32 %v36, 0.6931472
    %v38 = vmul.f32 -0.5, %v32
    %v39 = vadd.f32 %v38, 1.0
    %v40 = vmul.f32 %v39, %v32
    %v41 = vand.u32 2147483647, %v32
    %vm42 = vcmp.lt.f32.partialorder %v41, 0.0004427343
    %v43 = vsel %vm42, %v40, %v37
    %v44 = vadd.f32 %v34, 1.0
    %v45 = vlog2.pop %v44
    %v46 = vmul.f32 %v45, 0.6931472
    %v47 = vmul.f32 -0.5, %v34
    %v48 = vadd.f32 %v47, 1.0
    %v49 = vmul.f32 %v48, %v34
    %v50 = vand.u32 2147483647, %v34
    %vm51 = vcmp.lt.f32.partialorder %v50, 0.0004427343
    %v52 = vsel %vm51, %v49, %v46
    %v53 = vadd.f32 %v25, %v43
    %v54 = vadd.f32 %v26, %v52
    %v55 = vsub.f32 %v53, 0.6931472
    %v56 = vsub.f32 %v54, 0.6931472
    %57 = vst [vmem:[#allocation5] sm:$0xff] %v55
    %58 = vst [vmem:[#allocation5 + $0x8] sm:$0xff] %v56
    // Predicated region
    $region10: #{tpu_custom_call.1} parent=1 // pred_check
      _
    $region11: #{tpu_custom_call.1} parent=1 // pred_check_branch
      %60 = sbr.rel (0) target = $region13
    $region12: #{tpu_custom_call.1} parent=1 // pred_region
      %s62 = ssub.s32 256, 256
      %63 = vsyncadd [#allocation4], %s62
      %s64 = sshll.u32 [#allocation5], 4
      %s65 = int_to_ptr.vmem [resolvable:$true] %s64
      %70 = dma.vmem_to_hbm [thread:$0]  %s65, 256, %s1, [#allocation4], 128, 128, 8
    $region13: #{tpu_custom_call.1} parent=1 // pred_fallthru
      _
    // Predicated region
    $region14: #{tpu_custom_call.1} parent=1 // pred_check
      _
    $region15: #{tpu_custom_call.1} parent=1 // pred_check_branch
      %72 = sbr.rel (0) target = $region17
    $region16: #{tpu_custom_call.1} parent=1 // pred_region
      %73 = dma.done [#allocation4], 256
    $region17: #{tpu_custom_call.1} parent=1 // pred_fallthru
      _
    %74 = vsyncpa [#allocation3], 1
    %75 = vsyncpa [#allocation4], 1

</llo_original>
